<compile_context>
chip_gen: v7x
topology: tpu7x:2x2x1
jax: 0.10.0
libtpu: 0.0.40
codegen_flags: <defaults>
</compile_context>

<pallas_src>
import functools

import jax
import jax.numpy as jnp
import numpy as np
from jax.experimental import pallas as pl
from jax.experimental.pallas import tpu as pltpu


def _se_layer_kernel(x_ref, params_ref, o_ref):
    # x_ref / o_ref : (bb, C, H*W)  -- H*W in the lane axis, C in sublanes
    # params_ref    : (C+1, 2*Cr+1) f32, packed as
    #                   [:C, :Cr]         = fc1.weight.T   (C, Cr)
    #                   [:C, Cr:2Cr]      = fc2.weight     (C, Cr)
    #                   [:C, 2Cr:2Cr+1]   = fc2.bias       (C, 1)
    #                   [C:C+1, :Cr]      = fc1.bias       (1, Cr)
    _, C, HW = x_ref.shape
    Cr = (params_ref.shape[1] - 1) // 2

    p = params_ref[...]                                   # tiny, one DMA
    w1 = p[:C, :Cr]                                       # (C, Cr)
    w2 = p[:C, Cr:2 * Cr]                                 # (C, Cr)
    b2 = p[:C, 2 * Cr:2 * Cr + 1]                         # (C, 1)
    b1 = p[C:C + 1, :Cr]                                  # (1, Cr)

    # Squeeze: global average pool over H*W (lane reduce + const reciprocal).
    pooled = jnp.sum(x_ref[...].astype(jnp.float32), axis=-1, keepdims=True)
    pooled = pooled * jnp.float32(1.0 / HW)               # (bb, C, 1)

    # Excite, entirely on VPU/XLU with C kept in the sublane axis:
    #   fc1 + relu : h[b, j] = relu(sum_c pooled[b, c] * w1[c, j] + b1[j])
    h = jnp.sum(pooled * w1[None, :, :], axis=1, keepdims=True)   # (bb, 1, Cr)
    h = jnp.maximum(h + b1[None, :, :], 0.0)
    #   fc2 + sigmoid : g[b, c] = sigmoid(sum_j h[b, j] * w2[c, j] + b2[c])
    g = jnp.sum(h * w2[None, :, :], axis=2, keepdims=True)        # (bb, C, 1)
    g = jax.nn.sigmoid(g + b2[None, :, :])                        # (bb, C, 1)

    # Scale: channel gate broadcast over the lane (H*W) axis.  Re-read x_ref
    # instead of reusing the pooled-path variable so the whole block is not
    # held live in vregs across the excite computation.
    o_ref[...] = (x_ref[...].astype(jnp.float32) * g).astype(o_ref.dtype)


@functools.partial(jax.jit, static_argnames=("batch_block",))
def se_layer(x, w_fc1, b_fc1, w_fc2, b_fc2, *, batch_block=None):
    """SELayer forward.

    x     : (B, C, H, W) NCHW (f32 or bf16)
    w_fc1 : (Cr, C), b_fc1: (Cr,)   -- PyTorch nn.Linear layout (out, in)
    w_fc2 : (C, Cr), b_fc2: (C,)
    batch_block : samples per grid step; None = auto (>=~1 MiB HBM per step,
                  capped so double-buffered in+out fits every generation's
                  scoped VMEM default).
    """
    B, C, H, W = x.shape
    Cr = w_fc1.shape[0]
    HW = H * W
    itemsize = jnp.dtype(x.dtype).itemsize

    # ---- pick the batch block (samples per grid step) -----------------------
    if batch_block is None:
        blk_bytes = C * HW * itemsize                       # one sample, one dir
        target_bb = max(1, (1 << 20) // (2 * blk_bytes))    # >=~1 MiB / step
        cap_bb = max(1, (12 << 20) // (4 * blk_bytes))      # 2x-buffered in+out
        bb = max(1, min(B, target_bb, cap_bb))
        while B % bb:                                       # divisor of B
            bb -= 1
        steps = B // bb
        if steps > 1 and steps % 2 == 1:
            # prefer an even step count so both v7x TensorCores get work
            for cand in range(bb, 0, -1):
                if B % cand == 0 and (B // cand) % 2 == 0:
                    bb = cand
                    break
    else:
        bb = batch_block
        assert B % bb == 0, "batch_block must divide B"

    # ---- pack the four tiny parameters into one lane-dense f32 buffer -------
    params = jnp.zeros((C + 1, 2 * Cr + 1), jnp.float32)
    params = params.at[:C, :Cr].set(w_fc1.T.astype(jnp.float32))
    params = params.at[:C, Cr:2 * Cr].set(w_fc2.astype(jnp.float32))
    params = params.at[:C, 2 * Cr].set(b_fc2.astype(jnp.float32))
    params = params.at[C, :Cr].set(b_fc1.astype(jnp.float32))

    x2 = x.reshape(B, C, HW)        # lane-dense view: H*W in the lane axis

    # Explicit VMEM budget (double-buffered in+out + params + slack), clamped
    # to a value that is safe on every generation's scoped default.
    vmem_need = 4 * bb * C * HW * itemsize + 2 * params.size * 4 + (1 << 20)
    vmem_limit = int(min(max(vmem_need, 4 << 20), 32 << 20))

    cost = pl.CostEstimate(
        flops=int(2 * B * C * HW + 4 * B * C * Cr),
        transcendentals=int(B * C),
        bytes_accessed=int(2 * B * C * HW * itemsize + params.size * 4),
    )

    out = pl.pallas_call(
        _se_layer_kernel,
        out_shape=jax.ShapeDtypeStruct((B, C, HW), x.dtype),
        grid=(B // bb,),
        in_specs=[
            pl.BlockSpec((bb, C, HW), lambda i: (i, 0, 0)),
            pl.BlockSpec((C + 1, 2 * Cr + 1), lambda i: (0, 0)),
        ],
        out_specs=pl.BlockSpec((bb, C, HW), lambda i: (i, 0, 0)),
        compiler_params=pltpu.CompilerParams(
            dimension_semantics=("parallel",),
            vmem_limit_bytes=vmem_limit),
        cost_estimate=cost,
    )(x2, params)
    return out.reshape(B, C, H, W)


def _reference(x, w_fc1, b_fc1, w_fc2, b_fc2):
    """Pure-JAX reference of SELayer.forward (NCHW)."""
    y = x.mean(axis=(2, 3))                           # (B, C)
    y = jax.nn.relu(y @ w_fc1.T + b_fc1)              # (B, Cr)
    y = jax.nn.sigmoid(y @ w_fc2.T + b_fc2)           # (B, C)
    return x * y[:, :, None, None]


if __name__ == "__main__":
    # SELayer(channel=32, reduction=16), input 2x32x16x16 (NCHW)
    B, C, H, W = 2, 32, 16, 16
    RED = 16
    CR = C // RED   # = 2

    key = jax.random.PRNGKey(0)
    ks = jax.random.split(key, 5)
    x = jax.random.normal(ks[0], (B, C, H, W), jnp.float32)
    w_fc1 = jax.random.normal(ks[1], (CR, C), jnp.float32) * 0.1
    b_fc1 = jax.random.normal(ks[2], (CR,), jnp.float32) * 0.1
    w_fc2 = jax.random.normal(ks[3], (C, CR), jnp.float32) * 0.1
    b_fc2 = jax.random.normal(ks[4], (C,), jnp.float32) * 0.1

    out = se_layer(x, w_fc1, b_fc1, w_fc2, b_fc2)
    out = jax.block_until_ready(out)

    ref = _reference(x, w_fc1, b_fc1, w_fc2, b_fc2)
    np.testing.assert_allclose(np.asarray(out), np.asarray(ref),
                               rtol=1e-5, atol=1e-5)
    print("KERNEL_OK")
</pallas_src>

<mosaic_0001>
module attributes {stable_mosaic.version = 11 : i64} {
  func.func @_se_layer_kernel(%arg0: i32, %arg1: memref<2x32x256xf32, #tpu.memory_space<vmem>>, %arg2: memref<33x5xf32, #tpu.memory_space<vmem>>, %arg3: memref<2x32x256xf32, #tpu.memory_space<vmem>>) attributes {dimension_semantics = [#tpu.dimension_semantics<parallel>], iteration_bounds = array<i64: 1>, scalar_prefetch = 0 : i64, scratch_operands = 0 : i64, tpu.core_type = #tpu.core_type<tc>, window_params = [{transform_indices = @transform_0, window_bounds = array<i64: 2, 32, 256>}, {pipeline_mode = #tpu.pipeline_mode<synchronous>, transform_indices = @transform_1, window_bounds = array<i64: 33, 5>}, {transform_indices = @transform_2, window_bounds = array<i64: 2, 32, 256>}]} {
    %c0 = arith.constant 0 : index
    %c0_0 = arith.constant 0 : index
    %0 = vector.load %arg2[%c0, %c0_0] : memref<33x5xf32, #tpu.memory_space<vmem>>, vector<33x5xf32>
    %1 = vector.extract_strided_slice %0 {offsets = [0, 0], sizes = [32, 2], strides = [1, 1]} : vector<33x5xf32> to vector<32x2xf32>
    %2 = vector.extract_strided_slice %0 {offsets = [0, 2], sizes = [32, 2], strides = [1, 1]} : vector<33x5xf32> to vector<32x2xf32>
    %3 = vector.extract_strided_slice %0 {offsets = [0, 4], sizes = [32, 1], strides = [1, 1]} : vector<33x5xf32> to vector<32x1xf32>
    %4 = vector.extract_strided_slice %0 {offsets = [32, 0], sizes = [1, 2], strides = [1, 1]} : vector<33x5xf32> to vector<1x2xf32>
    %c0_1 = arith.constant 0 : index
    %c0_2 = arith.constant 0 : index
    %c0_3 = arith.constant 0 : index
    %5 = vector.load %arg1[%c0_1, %c0_2, %c0_3] : memref<2x32x256xf32, #tpu.memory_space<vmem>>, vector<2x32x256xf32>
    %cst = arith.constant dense<0.000000e+00> : vector<2x32xf32>
    %6 = vector.multi_reduction <add>, %5, %cst [2] : vector<2x32x256xf32> to vector<2x32xf32>
    %7 = vector.shape_cast %6 : vector<2x32xf32> to vector<2x32x1xf32>
    %cst_4 = arith.constant 3.906250e-03 : f32
    %8 = vector.broadcast %cst_4 : f32 to vector<2x32x1xf32>
    %9 = arith.mulf %7, %8 : vector<2x32x1xf32>
    %10 = vector.shape_cast %1 : vector<32x2xf32> to vector<1x32x2xf32>
    %11 = vector.broadcast %9 : vector<2x32x1xf32> to vector<2x32x2xf32>
    %12 = vector.broadcast %10 : vector<1x32x2xf32> to vector<2x32x2xf32>
    %13 = arith.mulf %11, %12 : vector<2x32x2xf32>
    %cst_5 = arith.constant dense<0.000000e+00> : vector<2x2xf32>
    %14 = vector.multi_reduction <add>, %13, %cst_5 [1] : vector<2x32x2xf32> to vector<2x2xf32>
    %15 = vector.shape_cast %14 : vector<2x2xf32> to vector<2x1x2xf32>
    %16 = vector.shape_cast %4 : vector<1x2xf32> to vector<1x1x2xf32>
    %17 = vector.broadcast %16 : vector<1x1x2xf32> to vector<2x1x2xf32>
    %18 = arith.addf %15, %17 : vector<2x1x2xf32>
    %cst_6 = arith.constant 0.000000e+00 : f32
    %19 = vector.broadcast %cst_6 : f32 to vector<2x1x2xf32>
    %20 = arith.maximumf %18, %19 : vector<2x1x2xf32>
    %21 = vector.shape_cast %2 : vector<32x2xf32> to vector<1x32x2xf32>
    %22 = vector.broadcast %20 : vector<2x1x2xf32> to vector<2x32x2xf32>
    %23 = vector.broadcast %21 : vector<1x32x2xf32> to vector<2x32x2xf32>
    %24 = arith.mulf %22, %23 : vector<2x32x2xf32>
    %cst_7 = arith.constant dense<0.000000e+00> : vector<2x32xf32>
    %25 = vector.multi_reduction <add>, %24, %cst_7 [2] : vector<2x32x2xf32> to vector<2x32xf32>
    %26 = vector.shape_cast %25 : vector<2x32xf32> to vector<2x32x1xf32>
    %27 = vector.shape_cast %3 : vector<32x1xf32> to vector<1x32x1xf32>
    %28 = vector.broadcast %27 : vector<1x32x1xf32> to vector<2x32x1xf32>
    %29 = arith.addf %26, %28 : vector<2x32x1xf32>
    %30 = arith.negf %29 : vector<2x32x1xf32>
    %31 = math.exp %30 : vector<2x32x1xf32>
    %cst_8 = arith.constant 1.000000e+00 : f32
    %32 = vector.broadcast %cst_8 : f32 to vector<2x32x1xf32>
    %33 = arith.addf %32, %31 : vector<2x32x1xf32>
    %34 = arith.divf %32, %33 : vector<2x32x1xf32>
    %c0_9 = arith.constant 0 : index
    %c0_10 = arith.constant 0 : index
    %c0_11 = arith.constant 0 : index
    %35 = vector.load %arg1[%c0_9, %c0_10, %c0_11] : memref<2x32x256xf32, #tpu.memory_space<vmem>>, vector<2x32x256xf32>
    %36 = vector.broadcast %34 : vector<2x32x1xf32> to vector<2x32x256xf32>
    %37 = arith.mulf %35, %36 : vector<2x32x256xf32>
    %c0_12 = arith.constant 0 : index
    %c0_13 = arith.constant 0 : index
    %c0_14 = arith.constant 0 : index
    %38 = vector.load %arg3[%c0_12, %c0_13, %c0_14] : memref<2x32x256xf32, #tpu.memory_space<vmem>>, vector<2x32x256xf32>
    tpu.vector_store %arg3[%c0_12, %c0_13, %c0_14], %37 {strides = array<i32>} : memref<2x32x256xf32, #tpu.memory_space<vmem>>, vector<2x32x256xf32>,
    return
  }
  func.func @transform_0(%arg0: i32) -> (i32, i32, i32) {
    %c0_i32 = arith.constant 0 : i32
    %c0_i32_0 = arith.constant 0 : i32
    %c0_i32_1 = arith.constant 0 : i32
    return %arg0, %c0_i32, %c0_i32_0 : i32, i32, i32
  }
  func.func @transform_1(%arg0: i32) -> (i32, i32) {
    %c0_i32 = arith.constant 0 : i32
    %c0_i32_0 = arith.constant 0 : i32
    %c0_i32_1 = arith.constant 0 : i32
    return %c0_i32, %c0_i32_0 : i32, i32
  }
  func.func @transform_2(%arg0: i32) -> (i32, i32, i32) {
    %c0_i32 = arith.constant 0 : i32
    %c0_i32_0 = arith.constant 0 : i32
    %c0_i32_1 = arith.constant 0 : i32
    return %arg0, %c0_i32, %c0_i32_0 : i32, i32, i32
  }
}

</mosaic_0001>

<llo_original>
// kernel: se_layer.1
$region0: #{se_layer.1}
  #allocation0 [shape = 'u32[]', space=smem, size = 0x4, offset = 0x4, fixed_abs, tag = 'smem constant byte address 0x4 - core index']
  #allocation1 [shape = 'u32[144,128]{1,0:T(1,128)}', space=vmem, size = 0x12000, scoped, tag = 'internal scratch']
  %s0 = inlined_call_operand.vmem [shape: f32[2,32,256], index: 0, kind: input, shape index: {}]
  %s1 = inlined_call_operand.vmem [shape: f32[33,5], index: 1, kind: input, shape index: {}]
  %s2 = inlined_call_operand.vmem [shape: f32[2,32,256], index: 2, kind: output, shape index: {}]
  %s3 = sld [smem:[#allocation0]]
  $region18: #{se_layer.1} parent=0
    _
  %s5 = ssub.s32 1, %s3
  %s6 = scalar_select 0, %s5, %s3
  // Predicated region
  $region2: #{se_layer.1} parent=0 // pred_check
    _
  $region3: #{se_layer.1} parent=0 // pred_check_branch
    %8 = sbr.rel (0) target = $region5
  $region4: #{se_layer.1} parent=0 // pred_region
    _
  $region5: #{se_layer.1} parent=0 // pred_fallthru
    _
  // Predicated region
  $region6: #{se_layer.1} parent=0 // pred_check
    _
  $region7: #{se_layer.1} parent=0 // pred_check_branch
    %10 = sbr.rel (0) target = $region9
  $region8: #{se_layer.1} parent=0 // pred_region
    _
  $region9: #{se_layer.1} parent=0 // pred_fallthru
    _
  %v11 = vld [vmem:[%s1] sm:$0xff]
  %v12 = vld [vmem:[%s1 + $0x8] sm:$0xff]
  %v13 = vld [vmem:[%s1 + $0x10] sm:$0xff]
  %v14 = vld [vmem:[%s1 + $0x18] sm:$0xff]
  %v15 = vld [vmem:[%s1 + $0x20] sm:$0x1]
  %v16 = vld [vmem:[%s0] sm:$0xff]
  %v17 = vld [vmem:[%s0 + $0x8] sm:$0xff]
  %v18 = vld [vmem:[%s0 + $0x10] sm:$0xff]
  %v19 = vld [vmem:[%s0 + $0x18] sm:$0xff]
  %v20 = vld [vmem:[%s0 + $0x20] sm:$0xff]
  %v21 = vld [vmem:[%s0 + $0x28] sm:$0xff]
  %v22 = vld [vmem:[%s0 + $0x30] sm:$0xff]
  %v23 = vld [vmem:[%s0 + $0x38] sm:$0xff]
  %v24 = vld [vmem:[%s0 + $0x40] sm:$0xff]
  %v25 = vld [vmem:[%s0 + $0x48] sm:$0xff]
  %v26 = vld [vmem:[%s0 + $0x50] sm:$0xff]
  %v27 = vld [vmem:[%s0 + $0x58] sm:$0xff]
  %v28 = vld [vmem:[%s0 + $0x60] sm:$0xff]
  %v29 = vld [vmem:[%s0 + $0x68] sm:$0xff]
  %v30 = vld [vmem:[%s0 + $0x70] sm:$0xff]
  %v31 = vld [vmem:[%s0 + $0x78] sm:$0xff]
  %v32 = vadd.f32 %v16, %v17
  %33 = vadd.xlane.f32.xlu0 %v32
  %v34 = vpop.xlane.xlu0 %33
  %v35 = vadd.f32 %v18, %v19
  %36 = vadd.xlane.f32.xlu0 %v35
  %v37 = vpop.xlane.xlu0 %36
  %v38 = vadd.f32 %v20, %v21
  %39 = vadd.xlane.f32.xlu0 %v38
  %v40 = vpop.xlane.xlu0 %39
  %v41 = vadd.f32 %v22, %v23
  %42 = vadd.xlane.f32.xlu0 %v41
  %v43 = vpop.xlane.xlu0 %42
  %v44 = vadd.f32 %v24, %v25
  %45 = vadd.xlane.f32.xlu0 %v44
  %v46 = vpop.xlane.xlu0 %45
  %v47 = vadd.f32 %v26, %v27
  %48 = vadd.xlane.f32.xlu0 %v47
  %v49 = vpop.xlane.xlu0 %48
  %v50 = vadd.f32 %v28, %v29
  %51 = vadd.xlane.f32.xlu0 %v50
  %v52 = vpop.xlane.xlu0 %51
  %v53 = vadd.f32 %v30, %v31
  %54 = vadd.xlane.f32.xlu0 %v53
  %v55 = vpop.xlane.xlu0 %54
  %v56 = vmul.f32 %v34, 0.00390625
  %v57 = vmul.f32 %v37, 0.00390625
  %v58 = vmul.f32 %v40, 0.00390625
  %v59 = vmul.f32 %v43, 0.00390625
  %v60 = vmul.f32 %v46, 0.00390625
  %v61 = vmul.f32 %v49, 0.00390625
  %v62 = vmul.f32 %v52, 0.00390625
  %v63 = vmul.f32 %v55, 0.00390625
  %v64 = vmul.f32 %v56, %v11
  %v65 = vmul.f32 %v57, %v12
  %v66 = vmul.f32 %v58, %v13
  %v67 = vmul.f32 %v59, %v14
  %v68 = vmul.f32 %v60, %v11
  %v69 = vmul.f32 %v61, %v12
  %v70 = vmul.f32 %v62, %v13
  %v71 = vmul.f32 %v63, %v14
  %vm72 = vcmask 15360
  %v73 = vsel %vm72, %v64, 0.0
  %v74 = vsel %vm72, %v65, 0.0
  %v75 = vadd.f32 %v73, %v74
  %v76 = vsel %vm72, %v66, 0.0
  %v77 = vadd.f32 %v75, %v76
  %v78 = vsel %vm72, %v67, 0.0
  %v79 = vadd.f32 %v77, %v78
  %v80 = vrot.slane %v79, 4
  %v81 = vadd.f32 %v79, %v80
  %v82 = vrot.slane %v81, 2
  %v83 = vadd.f32 %v81, %v82
  %v84 = vrot.slane %v83, 1
  %v85 = vadd.f32 %v83, %v84
  %v86 = vsel %vm72, %v68, 0.0
  %v87 = vsel %vm72, %v69, 0.0
  %v88 = vadd.f32 %v86, %v87
  %v89 = vsel %vm72, %v70, 0.0
  %v90 = vadd.f32 %v88, %v89
  %v91 = vsel %vm72, %v71, 0.0
  %v92 = vadd.f32 %v90, %v91
  %v93 = vrot.slane %v92, 4
  %v94 = vadd.f32 %v92, %v93
  %v95 = vrot.slane %v94, 2
  %v96 = vadd.f32 %v94, %v95
  %v97 = vrot.slane %v96, 1
  %v98 = vadd.f32 %v96, %v97
  %v99 = vadd.f32 %v85, %v15
  %v100 = vadd.f32 %v98, %v15
  %v101 = vmax.f32 %v99, 0.0
  %v102 = vmax.f32 %v100, 0.0
  %v103 = vlaneseq
  %v104 = vshrl.u32 %v103, 7
  %v105 = vsub.s32 0, %v104
  %v106 = vrot.slane %v101, %v105
  %v107 = vlaneseq
  %v108 = vshrl.u32 %v107, 7
  %v109 = vsub.s32 0, %v108
  %v110 = vrot.slane %v102, %v109
  %115 = vrot.lane.b32.xlu0 %v11, 126
  %v116 = vpop.permute.xlu0 %115
  %117 = vrot.lane.b32.xlu0 %v12, 126
  %v118 = vpop.permute.xlu0 %117
  %119 = vrot.lane.b32.xlu0 %v13, 126
  %v120 = vpop.permute.xlu0 %119
  %121 = vrot.lane.b32.xlu0 %v14, 126
  %v122 = vpop.permute.xlu0 %121
  %v127 = vmul.f32 %v106, %v116
  %v128 = vmul.f32 %v106, %v118
  %v129 = vmul.f32 %v106, %v120
  %v130 = vmul.f32 %v106, %v122
  %v131 = vmul.f32 %v110, %v116
  %v132 = vmul.f32 %v110, %v118
  %v133 = vmul.f32 %v110, %v120
  %v134 = vmul.f32 %v110, %v122
  %v135 = vsel %vm72, %v127, 0.0
  %136 = vadd.xlane.f32.xlu0 %v135
  %v137 = vpop.xlane.xlu0 %136
  %v138 = vsel %vm72, %v128, 0.0
  %139 = vadd.xlane.f32.xlu0 %v138
  %v140 = vpop.xlane.xlu0 %139
  %v141 = vsel %vm72, %v129, 0.0
  %142 = vadd.xlane.f32.xlu0 %v141
  %v143 = vpop.xlane.xlu0 %142
  %v144 = vsel %vm72, %v130, 0.0
  %145 = vadd.xlane.f32.xlu0 %v144
  %v146 = vpop.xlane.xlu0 %145
  %v147 = vsel %vm72, %v131, 0.0
  %148 = vadd.xlane.f32.xlu0 %v147
  %v149 = vpop.xlane.xlu0 %148
  %v150 = vsel %vm72, %v132, 0.0
  %151 = vadd.xlane.f32.xlu0 %v150
  %v152 = vpop.xlane.xlu0 %151
  %v153 = vsel %vm72, %v133, 0.0
  %154 = vadd.xlane.f32.xlu0 %v153
  %v155 = vpop.xlane.xlu0 %154
  %v156 = vsel %vm72, %v134, 0.0
  %157 = vadd.xlane.f32.xlu0 %v156
  %v158 = vpop.xlane.xlu0 %157
  %v159 = vadd.f32 %v137, %v11
  %v160 = vadd.f32 %v140, %v12
  %v161 = vadd.f32 %v143, %v13
  %v162 = vadd.f32 %v146, %v14
  %v163 = vadd.f32 %v149, %v11
  %v164 = vadd.f32 %v152, %v12
  %v165 = vadd.f32 %v155, %v13
  %v166 = vadd.f32 %v158, %v14
  %v167 = vxor.u32 %v159, 2147483648
  %v168 = vxor.u32 %v160, 2147483648
  %v169 = vxor.u32 %v161, 2147483648
  %v170 = vxor.u32 %v162, 2147483648
  %v171 = vxor.u32 %v163, 2147483648
  %v172 = vxor.u32 %v164, 2147483648
  %v173 = vxor.u32 %v165, 2147483648
  %v174 = vxor.u32 %v166, 2147483648
  %v175 = vmul.f32 %v167, 1.442695
  %v176 = vpow.pop %v175
  %v177 = vmul.f32 %v168, 1.442695
  %v178 = vpow.pop %v177
  %v179 = vmul.f32 %v169, 1.442695
  %v180 = vpow.pop %v179
  %v181 = vmul.f32 %v170, 1.442695
  %v182 = vpow.pop %v181
  %v183 = vmul.f32 %v171, 1.442695
  %v184 = vpow.pop %v183
  %v185 = vmul.f32 %v172, 1.442695
  %v186 = vpow.pop %v185
  %v187 = vmul.f32 %v173, 1.442695
  %v188 = vpow.pop %v187
  %v189 = vmul.f32 %v174, 1.442695
  %v190 = vpow.pop %v189
  %v191 = vadd.f32 %v176, 1.0
  %v192 = vadd.f32 %v178, 1.0
  %v193 = vadd.f32 %v180, 1.0
  %v194 = vadd.f32 %v182, 1.0
  %v195 = vadd.f32 %v184, 1.0
  %v196 = vadd.f32 %v186, 1.0
  %v197 = vadd.f32 %v188, 1.0
  %v198 = vadd.f32 %v190, 1.0
  %v199 = vrcp.pop %v191
  %v200 = vmul.f32 1.0, %v199
  %v201 = vrcp.pop %v192
  %v202 = vmul.f32 1.0, %v201
  %v203 = vrcp.pop %v193
  %v204 = vmul.f32 1.0, %v203
  %v205 = vrcp.pop %v194
  %v206 = vmul.f32 1.0, %v205
  %v207 = vrcp.pop %v195
  %v208 = vmul.f32 1.0, %v207
  %v209 = vrcp.pop %v196
  %v210 = vmul.f32 1.0, %v209
  %v211 = vrcp.pop %v197
  %v212 = vmul.f32 1.0, %v211
  %v213 = vrcp.pop %v198
  %v214 = vmul.f32 1.0, %v213
  %216 = vset.pattern.permute.xlu0 4
  %217 = vperm.xlu0 %216, %v200
  %v218 = vpop.permute.xlu0 %217
  %221 = vset.pattern.permute.xlu0 4
  %222 = vperm.xlu0 %221, %v202
  %v223 = vpop.permute.xlu0 %222
  %226 = vset.pattern.permute.xlu0 4
  %227 = vperm.xlu0 %226, %v204
  %v228 = vpop.permute.xlu0 %227
  %231 = vset.pattern.permute.xlu0 4
  %232 = vperm.xlu0 %231, %v206
  %v233 = vpop.permute.xlu0 %232
  %236 = vset.pattern.permute.xlu0 4
  %237 = vperm.xlu0 %236, %v208
  %v238 = vpop.permute.xlu0 %237
  %241 = vset.pattern.permute.xlu0 4
  %242 = vperm.xlu0 %241, %v210
  %v243 = vpop.permute.xlu0 %242
  %246 = vset.pattern.permute.xlu0 4
  %247 = vperm.xlu0 %246, %v212
  %v248 = vpop.permute.xlu0 %247
  %251 = vset.pattern.permute.xlu0 4
  %252 = vperm.xlu0 %251, %v214
  %v253 = vpop.permute.xlu0 %252
  %v255 = vmul.f32 %v16, %v218
  %v256 = vmul.f32 %v17, %v218
  %v257 = vmul.f32 %v18, %v223
  %v258 = vmul.f32 %v19, %v223
  %v259 = vmul.f32 %v20, %v228
  %v260 = vmul.f32 %v21, %v228
  %v261 = vmul.f32 %v22, %v233
  %v262 = vmul.f32 %v23, %v233
  %v263 = vmul.f32 %v24, %v238
  %v264 = vmul.f32 %v25, %v238
  %v265 = vmul.f32 %v26, %v243
  %v266 = vmul.f32 %v27, %v243
  %v267 = vmul.f32 %v28, %v248
  %v268 = vmul.f32 %v29, %v248
  %v269 = vmul.f32 %v30, %v253
  %v270 = vmul.f32 %v31, %v253
  %271 = vst [vmem:[%s2] sm:$0xff] %v255
  %272 = vst [vmem:[%s2 + $0x8] sm:$0xff] %v256
  %273 = vst [vmem:[%s2 + $0x10] sm:$0xff] %v257
  %274 = vst [vmem:[%s2 + $0x18] sm:$0xff] %v258
  %275 = vst [vmem:[%s2 + $0x20] sm:$0xff] %v259
  %276 = vst [vmem:[%s2 + $0x28] sm:$0xff] %v260
  %277 = vst [vmem:[%s2 + $0x30] sm:$0xff] %v261
  %278 = vst [vmem:[%s2 + $0x38] sm:$0xff] %v262
  %279 = vst [vmem:[%s2 + $0x40] sm:$0xff] %v263
  %280 = vst [vmem:[%s2 + $0x48] sm:$0xff] %v264
  %281 = vst [vmem:[%s2 + $0x50] sm:$0xff] %v265
  %282 = vst [vmem:[%s2 + $0x58] sm:$0xff] %v266
  %283 = vst [vmem:[%s2 + $0x60] sm:$0xff] %v267
  %284 = vst [vmem:[%s2 + $0x68] sm:$0xff] %v268
  %285 = vst [vmem:[%s2 + $0x70] sm:$0xff] %v269
  %286 = vst [vmem:[%s2 + $0x78] sm:$0xff] %v270
  // Predicated region
  $region10: #{se_layer.1} parent=0 // pred_check
    _
  $region11: #{se_layer.1} parent=0 // pred_check_branch
    %288 = sbr.rel (0) target = $region13
  $region12: #{se_layer.1} parent=0 // pred_region
    _
  $region13: #{se_layer.1} parent=0 // pred_fallthru
    _
  // Predicated region
  $region14: #{se_layer.1} parent=0 // pred_check
    _
  $region15: #{se_layer.1} parent=0 // pred_check_branch
    %290 = sbr.rel (0) target = $region17
  $region16: #{se_layer.1} parent=0 // pred_region
    _
  $region17: #{se_layer.1} parent=0 // pred_fallthru
    _

</llo_original>
